<compile_context>
chip_gen: v5e
topology: v5e:2x2
jax: 0.10.0
libtpu: 0.0.40
codegen_flags: <defaults>
</compile_context>

<pallas_src>
import jax
import jax.numpy as jnp
from jax.experimental import pallas as pl
from jax.experimental.pallas import tpu as pltpu


def ffn_kernel(x_ref, w1_ref, b1_ref, w2_ref, b2_ref, o_ref, acc_ref):
    # x_ref:  (tm, D)    (f32 or bf16)
    # w1_ref: (D, tk)    (f32 or bf16)     b1_ref: (1, tk)  f32
    # w2_ref: (tk, D)    (f32 or bf16)     b2_ref: (1, D)   f32
    # o_ref:  (tm, D)    acc_ref: (tm, D) f32 scratch (resident across k)
    k = pl.program_id(1)

    @pl.when(k == 0)
    def _init():
        acc_ref[...] = jnp.zeros_like(acc_ref)

    # First matmul on the MXU with f32 accumulation; bias + ReLU on the VPU
    # in f32 (keeps the epilogue f32 on v5e as well).
    h = jnp.dot(x_ref[...], w1_ref[...], preferred_element_type=jnp.float32)
    h = jnp.maximum(h + b1_ref[...], 0.0)

    # Second matmul: cast the activations to the weight dtype for the MXU,
    # accumulate in f32.  ReLU + per-hidden-unit bias are elementwise over H,
    # so summing partial products over H-tiles is exact.
    acc_ref[...] += jnp.dot(h.astype(w2_ref.dtype), w2_ref[...],
                            preferred_element_type=jnp.float32)

    @pl.when(k == pl.num_programs(1) - 1)
    def _finalize():
        o_ref[...] = (acc_ref[...] + b2_ref[...]).astype(o_ref.dtype)


def _round_up(a, b):
    return (a + b - 1) // b * b


def feed_forward_layer(x, w1, b1, w2, b2, *, tm=256, tk=512, mxu_dtype=None):
    """x: (B, S, D). w1: (D, 4D), b1: (4D,), w2: (4D, D), b2: (D,).

    mxu_dtype=jnp.bfloat16 casts x/W1/W2 for the MXU (f32 accumulation kept);
    None keeps everything f32.
    """
    B, S, D = x.shape
    H = w1.shape[1]
    M = B * S
    out_dtype = x.dtype

    if mxu_dtype is not None:
        x = x.astype(mxu_dtype)
        w1 = w1.astype(mxu_dtype)
        w2 = w2.astype(mxu_dtype)
    b1_2 = b1.astype(jnp.float32).reshape(1, H)
    b2_2 = b2.astype(jnp.float32).reshape(1, D)

    # --- Row tiling: cap tm by the (8-aligned) row count, pad rows with zeros.
    tm = min(tm, _round_up(M, 8))
    m_pad = _round_up(M, tm)
    x2 = x.reshape(M, D)
    if m_pad != M:
        x2 = jnp.pad(x2, ((0, m_pad - M), (0, 0)))

    # --- Hidden-dim tiling: lane-aligned tk that divides H, else whole H.
    tk_eff = H
    for cand in (tk, 512, 256, 128):
        if cand <= H and H % cand == 0 and cand % 128 == 0:
            tk_eff = cand
            break
    nk = H // tk_eff

    itemsize = lambda a: a.dtype.itemsize
    cost = pl.CostEstimate(
        flops=4 * m_pad * D * H,           # 2*M*D*H per matmul, two matmuls
        transcendentals=0,
        bytes_accessed=(x2.size * itemsize(x2)
                        + w1.size * itemsize(w1)
                        + w2.size * itemsize(w2)
                        + b1_2.size * itemsize(b1_2)
                        + b2_2.size * itemsize(b2_2)
                        + m_pad * D * jnp.dtype(out_dtype).itemsize),
    )

    out2 = pl.pallas_call(
        ffn_kernel,
        out_shape=jax.ShapeDtypeStruct((m_pad, D), out_dtype),
        grid_spec=pltpu.PrefetchScalarGridSpec(
            num_scalar_prefetch=0,
            grid=(m_pad // tm, nk),                     # reduction axis last
            in_specs=[
                pl.BlockSpec((tm, D), lambda i, k: (i, 0)),      # x row tile
                pl.BlockSpec((D, tk_eff), lambda i, k: (0, k)),  # W1 H-slice
                pl.BlockSpec((1, tk_eff), lambda i, k: (0, k)),  # b1 H-slice
                pl.BlockSpec((tk_eff, D), lambda i, k: (k, 0)),  # W2 H-slice
                pl.BlockSpec((1, D), lambda i, k: (0, 0)),       # b2
            ],
            out_specs=pl.BlockSpec((tm, D), lambda i, k: (i, 0)),
            scratch_shapes=[pltpu.VMEM((tm, D), jnp.float32)],
        ),
        compiler_params=pltpu.CompilerParams(
            dimension_semantics=("parallel", "arbitrary"),
            vmem_limit_bytes=48 << 20,
        ),
        cost_estimate=cost,
    )(x2, w1, b1_2, w2, b2_2)

    return out2[:M].reshape(B, S, D)


def init_params(key, input_dim):
    """Deterministic PyTorch-style nn.Linear init (uniform +/- 1/sqrt(fan_in))."""
    hidden = input_dim * 4
    k1, k2, k3, k4 = jax.random.split(key, 4)
    bound1 = 1.0 / (input_dim ** 0.5)
    bound2 = 1.0 / (hidden ** 0.5)
    # stored transposed relative to torch's (out, in) so the kernel does x @ W
    w1 = jax.random.uniform(k1, (input_dim, hidden), jnp.float32, -bound1, bound1)
    b1 = jax.random.uniform(k2, (hidden,), jnp.float32, -bound1, bound1)
    w2 = jax.random.uniform(k3, (hidden, input_dim), jnp.float32, -bound2, bound2)
    b2 = jax.random.uniform(k4, (input_dim,), jnp.float32, -bound2, bound2)
    return w1, b1, w2, b2


if __name__ == "__main__":
    key = jax.random.PRNGKey(0)
    kx, kp = jax.random.split(key)

    batch, seq, input_dim = 2, 8, 32
    x = jax.random.normal(kx, (batch, seq, input_dim), jnp.float32)
    w1, b1, w2, b2 = init_params(kp, input_dim)

    # Plain-JAX reference of the PyTorch forward.
    ref = jnp.maximum(x @ w1 + b1, 0.0) @ w2 + b2

    # Default f32 MXU path: bit-tight vs. the reference.
    out = feed_forward_layer(x, w1, b1, w2, b2)
    out = jax.block_until_ready(out)
    assert out.shape == (batch, seq, input_dim)
    assert jnp.allclose(out, ref, atol=1e-5, rtol=1e-5)

    # bf16 MXU-operand perf path (v6e/v7x): f32 accumulation, looser tolerance.
    out_bf16 = feed_forward_layer(x, w1, b1, w2, b2, mxu_dtype=jnp.bfloat16)
    out_bf16 = jax.block_until_ready(out_bf16)
    assert out_bf16.shape == (batch, seq, input_dim)
    assert jnp.allclose(out_bf16, ref, atol=5e-2, rtol=5e-2)

    # NOTE: the D=32 test shape is lane-starved by construction; real model
    # widths should keep D a multiple of 128 so the out_spec is lane-dense.
    print("KERNEL_OK")
</pallas_src>

<mosaic_0001>
module attributes {stable_mosaic.version = 11 : i64} {
  func.func @ffn_kernel(%arg0: i32, %arg1: i32, %arg2: memref<16x32xf32, #tpu.memory_space<vmem>>, %arg3: memref<32x128xf32, #tpu.memory_space<vmem>>, %arg4: memref<1x128xf32, #tpu.memory_space<vmem>>, %arg5: memref<128x32xf32, #tpu.memory_space<vmem>>, %arg6: memref<1x32xf32, #tpu.memory_space<vmem>>, %arg7: memref<16x32xf32, #tpu.memory_space<vmem>>, %arg8: memref<16x32xf32, #tpu.memory_space<vmem>>) attributes {dimension_semantics = [#tpu.dimension_semantics<parallel>, #tpu.dimension_semantics<arbitrary>], iteration_bounds = array<i64: 1, 1>, scalar_prefetch = 0 : i64, scratch_operands = 1 : i64, tpu.core_type = #tpu.core_type<tc>, window_params = [{transform_indices = @transform_0, window_bounds = array<i64: 16, 32>}, {transform_indices = @transform_1, window_bounds = array<i64: 32, 128>}, {transform_indices = @transform_2, window_bounds = array<i64: 1, 128>}, {transform_indices = @transform_3, window_bounds = array<i64: 128, 32>}, {pipeline_mode = #tpu.pipeline_mode<synchronous>, transform_indices = @transform_4, window_bounds = array<i64: 1, 32>}, {transform_indices = @transform_5, window_bounds = array<i64: 16, 32>}]} {
    %c0_i32 = arith.constant 0 : i32
    %0 = arith.cmpi eq, %arg1, %c0_i32 : i32
    %1 = arith.extui %0 : i1 to i32
    %c0_i32_0 = arith.constant 0 : i32
    %2 = arith.cmpi ne, %1, %c0_i32_0 : i32
    scf.if %2 {
      %cst_16 = arith.constant 0.000000e+00 : f32
      %19 = vector.broadcast %cst_16 : f32 to vector<16x32xf32>
      %c0_17 = arith.constant 0 : index
      %c0_18 = arith.constant 0 : index
      %20 = vector.load %arg8[%c0_17, %c0_18] : memref<16x32xf32, #tpu.memory_space<vmem>>, vector<16x32xf32>
      tpu.vector_store %arg8[%c0_17, %c0_18], %19 {strides = array<i32>} : memref<16x32xf32, #tpu.memory_space<vmem>>, vector<16x32xf32>,
    } else {
    }
    %c0 = arith.constant 0 : index
    %c0_1 = arith.constant 0 : index
    %3 = vector.load %arg2[%c0, %c0_1] : memref<16x32xf32, #tpu.memory_space<vmem>>, vector<16x32xf32>
    %c0_2 = arith.constant 0 : index
    %c0_3 = arith.constant 0 : index
    %4 = vector.load %arg3[%c0_2, %c0_3] : memref<32x128xf32, #tpu.memory_space<vmem>>, vector<32x128xf32>
    %cst = arith.constant dense<0.000000e+00> : vector<16x128xf32>
    %5 = tpu.matmul %3, %4, %cst {dimension_numbers = #tpu.dot_dimension_numbers<[1], [0], [0], [1], [0, 0, 1, 1], [], []>} : vector<16x32xf32>, vector<32x128xf32>, vector<16x128xf32> -> vector<16x128xf32>
    %c0_4 = arith.constant 0 : index
    %c0_5 = arith.constant 0 : index
    %6 = vector.load %arg4[%c0_4, %c0_5] : memref<1x128xf32, #tpu.memory_space<vmem>>, vector<1x128xf32>
    %7 = vector.broadcast %6 : vector<1x128xf32> to vector<16x128xf32>
    %8 = arith.addf %5, %7 : vector<16x128xf32>
    %cst_6 = arith.constant 0.000000e+00 : f32
    %9 = vector.broadcast %cst_6 : f32 to vector<16x128xf32>
    %10 = arith.maximumf %8, %9 : vector<16x128xf32>
    %c0_7 = arith.constant 0 : index
    %c0_8 = arith.constant 0 : index
    %11 = vector.load %arg8[%c0_7, %c0_8] : memref<16x32xf32, #tpu.memory_space<vmem>>, vector<16x32xf32>
    %c0_9 = arith.constant 0 : index
    %c0_10 = arith.constant 0 : index
    %12 = vector.load %arg5[%c0_9, %c0_10] : memref<128x32xf32, #tpu.memory_space<vmem>>, vector<128x32xf32>
    %cst_11 = arith.constant dense<0.000000e+00> : vector<16x32xf32>
    %13 = tpu.matmul %10, %12, %cst_11 {dimension_numbers = #tpu.dot_dimension_numbers<[1], [0], [0], [1], [0, 0, 1, 1], [], []>} : vector<16x128xf32>, vector<128x32xf32>, vector<16x32xf32> -> vector<16x32xf32>
    %14 = arith.addf %11, %13 : vector<16x32xf32>
    %c0_12 = arith.constant 0 : index
    %c0_13 = arith.constant 0 : index
    %15 = vector.load %arg8[%c0_12, %c0_13] : memref<16x32xf32, #tpu.memory_space<vmem>>, vector<16x32xf32>
    tpu.vector_store %arg8[%c0_12, %c0_13], %14 {strides = array<i32>} : memref<16x32xf32, #tpu.memory_space<vmem>>, vector<16x32xf32>,
    %c0_i32_14 = arith.constant 0 : i32
    %16 = arith.cmpi eq, %arg1, %c0_i32_14 : i32
    %17 = arith.extui %16 : i1 to i32
    %c0_i32_15 = arith.constant 0 : i32
    %18 = arith.cmpi ne, %17, %c0_i32_15 : i32
    scf.if %18 {
      %c0_16 = arith.constant 0 : index
      %c0_17 = arith.constant 0 : index
      %19 = vector.load %arg8[%c0_16, %c0_17] : memref<16x32xf32, #tpu.memory_space<vmem>>, vector<16x32xf32>
      %c0_18 = arith.constant 0 : index
      %c0_19 = arith.constant 0 : index
      %20 = vector.load %arg6[%c0_18, %c0_19] : memref<1x32xf32, #tpu.memory_space<vmem>>, vector<1x32xf32>
      %21 = vector.broadcast %20 : vector<1x32xf32> to vector<16x32xf32>
      %22 = arith.addf %19, %21 : vector<16x32xf32>
      %c0_20 = arith.constant 0 : index
      %c0_21 = arith.constant 0 : index
      %23 = vector.load %arg7[%c0_20, %c0_21] : memref<16x32xf32, #tpu.memory_space<vmem>>, vector<16x32xf32>
      tpu.vector_store %arg7[%c0_20, %c0_21], %22 {strides = array<i32>} : memref<16x32xf32, #tpu.memory_space<vmem>>, vector<16x32xf32>,
    } else {
    }
    return
  }
  func.func @transform_0(%arg0: i32, %arg1: i32) -> (i32, i32) {
    %c0_i32 = arith.constant 0 : i32
    %c0_i32_0 = arith.constant 0 : i32
    return %arg0, %c0_i32 : i32, i32
  }
  func.func @transform_1(%arg0: i32, %arg1: i32) -> (i32, i32) {
    %c0_i32 = arith.constant 0 : i32
    %c0_i32_0 = arith.constant 0 : i32
    return %c0_i32, %arg1 : i32, i32
  }
  func.func @transform_2(%arg0: i32, %arg1: i32) -> (i32, i32) {
    %c0_i32 = arith.constant 0 : i32
    %c0_i32_0 = arith.constant 0 : i32
    return %c0_i32, %arg1 : i32, i32
  }
  func.func @transform_3(%arg0: i32, %arg1: i32) -> (i32, i32) {
    %c0_i32 = arith.constant 0 : i32
    %c0_i32_0 = arith.constant 0 : i32
    return %arg1, %c0_i32 : i32, i32
  }
  func.func @transform_4(%arg0: i32, %arg1: i32) -> (i32, i32) {
    %c0_i32 = arith.constant 0 : i32
    %c0_i32_0 = arith.constant 0 : i32
    %c0_i32_1 = arith.constant 0 : i32
    return %c0_i32, %c0_i32_0 : i32, i32
  }
  func.func @transform_5(%arg0: i32, %arg1: i32) -> (i32, i32) {
    %c0_i32 = arith.constant 0 : i32
    %c0_i32_0 = arith.constant 0 : i32
    return %arg0, %c0_i32 : i32, i32
  }
}

</mosaic_0001>

<llo_original>
// kernel: tpu_custom_call.1
$region0: #{tpu_custom_call.1}
  #allocation0 [shape = 'u32[]', space=smem, size = 0x4, offset = 0x4, fixed_abs, tag = 'smem constant byte address 0x4 - core index']
  #allocation1 [shape = 'u32[72,128]{1,0:T(1,128)}', space=vmem, size = 0x9000, scoped, tag = 'internal scratch']
  #allocation2 [shape = 'f32[16,32]{1,0:T(8,128)}', space=vmem, size = 0x2000, scoped, tag = 'scratch operand']
  %s0 = inlined_call_operand.vmem [shape: f32[16,32], index: 0, kind: input, shape index: {}]
  %s1 = inlined_call_operand.vmem [shape: f32[32,128], index: 1, kind: input, shape index: {}]
  %s2 = inlined_call_operand.vmem [shape: f32[1,128], index: 2, kind: input, shape index: {}]
  %s3 = inlined_call_operand.vmem [shape: f32[128,32], index: 3, kind: input, shape index: {}]
  %s4 = inlined_call_operand.vmem [shape: f32[1,32], index: 4, kind: input, shape index: {}]
  %s5 = inlined_call_operand.hbm [shape: f32[16,32], index: 5, kind: output, shape index: {}]
  %s6 = sld [smem:[#allocation0]]
  $region38: #{tpu_custom_call.1} parent=0
    _
  %s8 = ssub.s32 1, %s6
  %s9 = scalar_select 0, %s8, %s6
  $region1: #{tpu_custom_call.1} parent=0
    #allocation3 [shape = 'u8[8192]{0}', space=vmem, size = 0x2000, scoped, tag = 'output window, operand 0, single buffered']
    #allocation4 [shape = 's32[1]{0}', space=sflag, size = 0x4, scoped, tag = 'scoped memory for tpu_custom_call.1']
    %10 = vsyncpa [#allocation4], 0
    // Predicated region
    $region2: #{tpu_custom_call.1} parent=1 // pred_check
      _
    $region3: #{tpu_custom_call.1} parent=1 // pred_check_branch
      %12 = sbr.rel (0) target = $region5
    $region4: #{tpu_custom_call.1} parent=1 // pred_region
      _
    $region5: #{tpu_custom_call.1} parent=1 // pred_fallthru
      _
    // Predicated region
    $region6: #{tpu_custom_call.1} parent=1 // pred_check
      _
    $region7: #{tpu_custom_call.1} parent=1 // pred_check_branch
      %14 = sbr.rel (0) target = $region9
    $region8: #{tpu_custom_call.1} parent=1 // pred_region
      _
    $region9: #{tpu_custom_call.1} parent=1 // pred_fallthru
      _
    // Predicated region
    $region10: #{tpu_custom_call.1} parent=1 // pred_check
      _
    $region11: #{tpu_custom_call.1} parent=1 // pred_check_branch
      %16 = sbr.rel (0) target = $region13
    $region12: #{tpu_custom_call.1} parent=1 // pred_region
      _
    $region13: #{tpu_custom_call.1} parent=1 // pred_fallthru
      _
    // Predicated region
    $region14: #{tpu_custom_call.1} parent=1 // pred_check
      _
    $region15: #{tpu_custom_call.1} parent=1 // pred_check_branch
      %18 = sbr.rel (0) target = $region17
    $region16: #{tpu_custom_call.1} parent=1 // pred_region
      _
    $region17: #{tpu_custom_call.1} parent=1 // pred_fallthru
      _
    // Predicated region
    $region18: #{tpu_custom_call.1} parent=1 // pred_check
      _
    $region19: #{tpu_custom_call.1} parent=1 // pred_check_branch
      %20 = sbr.rel (0) target = $region21
    $region20: #{tpu_custom_call.1} parent=1 // pred_region
      _
    $region21: #{tpu_custom_call.1} parent=1 // pred_fallthru
      _
    %p21 = scmp.eq.s32.totalorder 0, 0
    // Predicated region
    $region22: #{tpu_custom_call.1} parent=1 // pred_check
      %p22 = pneg %p21
    $region23: #{tpu_custom_call.1} parent=1 // pred_check_branch
      %24 = sbr.rel (%p22) target = $region25
    $region24: #{tpu_custom_call.1} parent=1 // pred_region
      %vm25 = vcmask 261120
      %26 = vst.msk [vmem:[#allocation2] sm:$0xff] %vm25, 0.0
      %27 = vst.msk [vmem:[#allocation2 + $0x8] sm:$0xff] %vm25, 0.0
    $region25: #{tpu_custom_call.1} parent=1 // pred_fallthru
      _
    %v28 = vld [vmem:[%s0] sm:$0xff]
    %v29 = vld [vmem:[%s0 + $0x8] sm:$0xff]
    %v30 = vld [vmem:[%s1] sm:$0xff]
    %v31 = vld [vmem:[%s1 + $0x8] sm:$0xff]
    %v32 = vld [vmem:[%s1 + $0x10] sm:$0xff]
    %v33 = vld [vmem:[%s1 + $0x18] sm:$0xff]
    %v34 = vld [vmem:[%s2] sm:$0x1]
    %v36 = vperm.slane %v34, 0
    %vm38 = vcmask 261120
    %v40 = vsel %vm38, %v28, 0
    %v43 = vsel %vm38, %v29, 0
    %45 = vmatpush.msra.mxu0 0.0
    %46 = vmatpush.msra.mxu0 0.0
    %47 = vmatpush.msra.mxu0 0.0
    %48 = vmatpush.msra.mxu0 0.0
    %49 = vmatpush.msra.mxu0 0.0
    %50 = vmatpush.msra.mxu0 0.0
    %51 = vmatpush.msra.mxu0 0.0
    %52 = vmatpush.msra.mxu0 0.0
    %53 = vmatpush.msra.mxu0 0.0
    %54 = vmatpush.msra.mxu0 0.0
    %55 = vmatpush.msra.mxu0 0.0
    %56 = vmatpush.msra.mxu0 0.0
    %57 = vmatpush.msra.mxu0 %v33
    %58 = vmatpush.msra.mxu0 %v32
    %59 = vmatpush.msra.mxu0 %v31
    %60 = vmatpush.msra.mxu0 %v30
    %61 = vmatmul.f32.gmra.mxu0 %v40
    %v62 = vpop.f32.mrf.mxu0
    %v63 = vadd.f32 %v36, %v62
    %64 = vmatmul.f32.gmra.mxu0 %v43
    %v65 = vpop.f32.mrf.mxu0
    %v66 = vadd.f32 %v36, %v65
    %67 = vdwg.mxu0
    %v68 = vmax.f32 %v63, 0.0
    %v69 = vmax.f32 %v66, 0.0
    %v70 = vld [vmem:[#allocation2] sm:$0xff]
    %v71 = vld [vmem:[#allocation2 + $0x8] sm:$0xff]
    %v72 = vld [vmem:[%s3] sm:$0xff]
    %v73 = vld [vmem:[%s3 + $0x8] sm:$0xff]
    %v74 = vld [vmem:[%s3 + $0x10] sm:$0xff]
    %v75 = vld [vmem:[%s3 + $0x18] sm:$0xff]
    %v76 = vld [vmem:[%s3 + $0x20] sm:$0xff]
    %v77 = vld [vmem:[%s3 + $0x28] sm:$0xff]
    %v78 = vld [vmem:[%s3 + $0x30] sm:$0xff]
    %v79 = vld [vmem:[%s3 + $0x38] sm:$0xff]
    %v80 = vld [vmem:[%s3 + $0x40] sm:$0xff]
    %v81 = vld [vmem:[%s3 + $0x48] sm:$0xff]
    %v82 = vld [vmem:[%s3 + $0x50] sm:$0xff]
    %v83 = vld [vmem:[%s3 + $0x58] sm:$0xff]
    %v84 = vld [vmem:[%s3 + $0x60] sm:$0xff]
    %v85 = vld [vmem:[%s3 + $0x68] sm:$0xff]
    %v86 = vld [vmem:[%s3 + $0x70] sm:$0xff]
    %v87 = vld [vmem:[%s3 + $0x78] sm:$0xff]
    %88 = vmatpush.msra.mxu0 %v87
    %89 = vmatpush.msra.mxu0 %v86
    %90 = vmatpush.msra.mxu0 %v85
    %91 = vmatpush.msra.mxu0 %v84
    %92 = vmatpush.msra.mxu0 %v83
    %93 = vmatpush.msra.mxu0 %v82
    %94 = vmatpush.msra.mxu0 %v81
    %95 = vmatpush.msra.mxu0 %v80
    %96 = vmatpush.msra.mxu0 %v79
    %97 = vmatpush.msra.mxu0 %v78
    %98 = vmatpush.msra.mxu0 %v77
    %99 = vmatpush.msra.mxu0 %v76
    %100 = vmatpush.msra.mxu0 %v75
    %101 = vmatpush.msra.mxu0 %v74
    %102 = vmatpush.msra.mxu0 %v73
    %103 = vmatpush.msra.mxu0 %v72
    %104 = vmatmul.f32.gmra.mxu0 %v68
    %v105 = vpop.f32.mrf.mxu0
    %v106 = vadd.f32 0.0, %v105
    %107 = vmatmul.f32.gmra.mxu0 %v69
    %v108 = vpop.f32.mrf.mxu0
    %v109 = vadd.f32 0.0, %v108
    %110 = vdwg.mxu0
    %v111 = vadd.f32 %v70, %v106
    %v112 = vadd.f32 %v71, %v109
    %113 = vst.msk [vmem:[#allocation2] sm:$0xff] %vm38, %v111
    %114 = vst.msk [vmem:[#allocation2 + $0x8] sm:$0xff] %vm38, %v112
    // Predicated region
    $region26: #{tpu_custom_call.1} parent=1 // pred_check
      %p115 = pneg %p21
    $region27: #{tpu_custom_call.1} parent=1 // pred_check_branch
      %117 = sbr.rel (%p115) target = $region29
    $region28: #{tpu_custom_call.1} parent=1 // pred_region
      %v118 = vld [vmem:[#allocation2] sm:$0xff]
      %v119 = vld [vmem:[#allocation2 + $0x8] sm:$0xff]
      %v120 = vld [vmem:[%s4] sm:$0x1]
      %v122 = vperm.slane %v120, 0
      %v124 = vadd.f32 %v118, %v122
      %v125 = vadd.f32 %v119, %v122
      %126 = vst.msk [vmem:[#allocation3] sm:$0xff] %vm38, %v124
      %127 = vst.msk [vmem:[#allocation3 + $0x8] sm:$0xff] %vm38, %v125
    $region29: #{tpu_custom_call.1} parent=1 // pred_fallthru
      _
    // Predicated region
    $region30: #{tpu_custom_call.1} parent=1 // pred_check
      _
    $region31: #{tpu_custom_call.1} parent=1 // pred_check_branch
      %129 = sbr.rel (0) target = $region33
    $region32: #{tpu_custom_call.1} parent=1 // pred_region
      %131 = vsyncadd [#allocation4], 0
      %s132 = sshll.u32 [#allocation3], 4
      %s133 = int_to_ptr.vmem [resolvable:$true] %s132
      %s134 = sshll.u32 %s5, 4
      %s135 = int_to_ptr.hbm [resolvable:$true] %s134
      %140 = dma.vmem_to_hbm [thread:$0]  %s133, 256, %s135, [#allocation4], 128, 128, 8
    $region33: #{tpu_custom_call.1} parent=1 // pred_fallthru
      _
    // Predicated region
    $region34: #{tpu_custom_call.1} parent=1 // pred_check
      _
    $region35: #{tpu_custom_call.1} parent=1 // pred_check_branch
      %142 = sbr.rel (0) target = $region37
    $region36: #{tpu_custom_call.1} parent=1 // pred_region
      %144 = dma.done [#allocation4], 256
    $region37: #{tpu_custom_call.1} parent=1 // pred_fallthru
      _
    %145 = vsyncpa [#allocation4], 1

</llo_original>
